<compile_context>
chip_gen: v7x
topology: tpu7x:2x2x1
jax: 0.10.0
libtpu: 0.0.40
codegen_flags: <defaults>
</compile_context>

<pallas_src>
import functools

import jax
import jax.numpy as jnp
from jax.experimental import pallas as pl
from jax.experimental.pallas import tpu as pltpu

_LANES = 128
# 2048 rows x 128 lanes x 4 B = 1 MiB per f32 tile; with in + out double
# buffered that is ~4 MiB of VMEM -> safe on v5e (16 MiB scoped), v6e (32 MiB)
# and v7x (32 MiB scoped / 64 MiB physical), while each grid step moves MiBs.
_TARGET_BLOCK_ROWS = 2048


def _uniform_from_u32(h):
    """murmur3 fmix32 avalanche -> uniform float32 in [0, 1)."""
    h = h ^ (h >> jnp.uint32(16))
    h = h * jnp.uint32(0x85EBCA6B)
    h = h ^ (h >> jnp.uint32(13))
    h = h * jnp.uint32(0xC2B2AE35)
    h = h ^ (h >> jnp.uint32(16))
    # Top 24 bits -> exact float32 in [0, 1).
    h24 = (h >> jnp.uint32(8)).astype(jnp.int32)  # < 2^24, non-negative
    return h24.astype(jnp.float32) * jnp.float32(1.0 / (1 << 24))


def _gaussian_noise_kernel(seed_ref, x_ref, o_ref, *, sigma, block_rows):
    """y = x + uniform[0,1) * sigma, noise generated in-kernel from a hash."""
    shape = x_ref.shape  # (block_rows, _LANES)
    row0 = pl.program_id(0) * block_rows

    # Global flat element index of every element in this tile.
    row_iota = jax.lax.broadcasted_iota(jnp.int32, shape, 0)
    col_iota = jax.lax.broadcasted_iota(jnp.int32, shape, 1)
    flat_idx = (row0 + row_iota) * shape[1] + col_iota

    # Mix in the seed (scalar, from SMEM) and hash to decorrelated uniforms.
    seed_u32 = seed_ref[0].astype(jnp.uint32) * jnp.uint32(0x9E3779B1)
    u = _uniform_from_u32(flat_idx.astype(jnp.uint32) ^ seed_u32)

    noise = (u * jnp.float32(sigma)).astype(x_ref.dtype)
    o_ref[...] = x_ref[...] + noise


def gaussian_noise(x, sigma, *, seed=0, training=True, block_rows=None):
    """Pallas implementation of GaussianNoise.forward (uniform noise, as in spec)."""
    if not training:
        return x  # eval path: identity, no kernel needed

    orig_shape = x.shape
    total = x.size

    # Lane-dense 2D view. Row-major reshape is copy-free; only pad when the
    # element count is not a multiple of 128 (rare).
    pad = (-total) % _LANES
    if pad:
        xf = jnp.pad(x.reshape(-1), (0, pad))
    else:
        xf = x.reshape(-1)
    rows = (total + pad) // _LANES
    xf = xf.reshape(rows, _LANES)

    # Tile sizing: big tiles to amortize per-grid-step overhead; either the
    # block covers the full row extent, or it is a multiple of 8 (sublane rule).
    if block_rows is None:
        block_rows = _TARGET_BLOCK_ROWS
    if block_rows >= rows:
        block_rows = rows
    else:
        block_rows = max(8, (block_rows // 8) * 8)

    grid = (pl.cdiv(rows, block_rows),)
    seed_arr = jnp.asarray([seed], dtype=jnp.int32)

    out = pl.pallas_call(
        functools.partial(
            _gaussian_noise_kernel, sigma=float(sigma), block_rows=block_rows
        ),
        out_shape=jax.ShapeDtypeStruct((rows, _LANES), x.dtype),
        grid_spec=pltpu.PrefetchScalarGridSpec(
            num_scalar_prefetch=1,
            grid=grid,
            in_specs=[pl.BlockSpec((block_rows, _LANES), lambda i, seed: (i, 0))],
            out_specs=pl.BlockSpec((block_rows, _LANES), lambda i, seed: (i, 0)),
        ),
        compiler_params=pltpu.CompilerParams(
            # Noise is a pure function of (seed, global index): no carried
            # state -> genuinely parallel (lets v7x shard across both TCs).
            dimension_semantics=("parallel",),
        ),
    )(seed_arr, xf)

    y = out.reshape(-1)
    if pad:
        y = y[:total]
    return y.reshape(orig_shape)


if __name__ == "__main__":
    key = jax.random.PRNGKey(0)
    # NCHW input, small shapes (batch=2, channels=4, spatial=16)
    x = jax.random.normal(key, (2, 4, 16, 16), dtype=jnp.float32)
    sigma = 0.1

    # Training path (uniform noise added in-kernel)
    y_train = jax.block_until_ready(gaussian_noise(x, sigma, seed=42, training=True))
    # Eval path (identity)
    y_eval = jax.block_until_ready(gaussian_noise(x, sigma, training=False))

    # Sanity checks: shape/dtype preserved, noise in [0, sigma), roughly
    # centered at sigma/2, eval path is exactly x.
    assert y_train.shape == x.shape and y_train.dtype == x.dtype
    diff = y_train - x
    assert bool(jnp.all(diff >= 0.0))
    assert bool(jnp.all(diff < sigma + 1e-6))
    mean_noise = float(jnp.mean(diff))
    assert 0.035 < mean_noise < 0.065, mean_noise
    assert bool(jnp.all(y_eval == x))

    print("KERNEL_OK")
</pallas_src>

<mosaic_0001>
module attributes {stable_mosaic.version = 11 : i64} {
  func.func @_gaussian_noise_kernel(%arg0: i32, %arg1: memref<1xi32, #tpu.memory_space<smem>>, %arg2: memref<16x128xf32, #tpu.memory_space<vmem>>, %arg3: memref<16x128xf32, #tpu.memory_space<vmem>>) attributes {dimension_semantics = [#tpu.dimension_semantics<parallel>], iteration_bounds = array<i64: 1>, scalar_prefetch = 1 : i64, scratch_operands = 0 : i64, tpu.core_type = #tpu.core_type<tc>, window_params = [{transform_indices = @transform_0, window_bounds = array<i64: 16, 128>}, {transform_indices = @transform_1, window_bounds = array<i64: 16, 128>}]} {
    %c16_i32 = arith.constant 16 : i32
    %0 = arith.muli %arg0, %c16_i32 : i32
    %1 = tpu.iota {dimensions = array<i32: 0>} : vector<16x128xi32>
    %2 = tpu.iota {dimensions = array<i32: 1>} : vector<16x128xi32>
    %3 = vector.broadcast %0 : i32 to vector<16x128xi32>
    %4 = arith.addi %3, %1 : vector<16x128xi32>
    %c128_i32 = arith.constant 128 : i32
    %5 = vector.broadcast %c128_i32 : i32 to vector<16x128xi32>
    %6 = arith.muli %4, %5 : vector<16x128xi32>
    %7 = arith.addi %6, %2 : vector<16x128xi32>
    %c0 = arith.constant 0 : index
    %8 = memref.load %arg1[%c0] : memref<1xi32, #tpu.memory_space<smem>>
    %c-1640531535_i32 = arith.constant -1640531535 : i32
    %9 = arith.muli %8, %c-1640531535_i32 : i32
    %10 = vector.broadcast %9 : i32 to vector<16x128xi32>
    %11 = arith.xori %7, %10 : vector<16x128xi32>
    %c16_i32_0 = arith.constant 16 : i32
    %12 = vector.broadcast %c16_i32_0 : i32 to vector<16x128xi32>
    %13 = arith.shrui %11, %12 : vector<16x128xi32>
    %14 = arith.xori %11, %13 : vector<16x128xi32>
    %c-2048144789_i32 = arith.constant -2048144789 : i32
    %15 = vector.broadcast %c-2048144789_i32 : i32 to vector<16x128xi32>
    %16 = arith.muli %14, %15 : vector<16x128xi32>
    %c13_i32 = arith.constant 13 : i32
    %17 = vector.broadcast %c13_i32 : i32 to vector<16x128xi32>
    %18 = arith.shrui %16, %17 : vector<16x128xi32>
    %19 = arith.xori %16, %18 : vector<16x128xi32>
    %c-1028477387_i32 = arith.constant -1028477387 : i32
    %20 = vector.broadcast %c-1028477387_i32 : i32 to vector<16x128xi32>
    %21 = arith.muli %19, %20 : vector<16x128xi32>
    %c16_i32_1 = arith.constant 16 : i32
    %22 = vector.broadcast %c16_i32_1 : i32 to vector<16x128xi32>
    %23 = arith.shrui %21, %22 : vector<16x128xi32>
    %24 = arith.xori %21, %23 : vector<16x128xi32>
    %c8_i32 = arith.constant 8 : i32
    %25 = vector.broadcast %c8_i32 : i32 to vector<16x128xi32>
    %26 = arith.shrui %24, %25 : vector<16x128xi32>
    %27 = arith.sitofp %26 : vector<16x128xi32> to vector<16x128xf32>
    %cst = arith.constant 5.96046448E-8 : f32
    %28 = vector.broadcast %cst : f32 to vector<16x128xf32>
    %29 = arith.mulf %27, %28 : vector<16x128xf32>
    %cst_2 = arith.constant 1.000000e-01 : f32
    %30 = vector.broadcast %cst_2 : f32 to vector<16x128xf32>
    %31 = arith.mulf %29, %30 : vector<16x128xf32>
    %c0_3 = arith.constant 0 : index
    %c0_4 = arith.constant 0 : index
    %32 = vector.load %arg2[%c0_3, %c0_4] : memref<16x128xf32, #tpu.memory_space<vmem>>, vector<16x128xf32>
    %33 = arith.addf %32, %31 : vector<16x128xf32>
    %c0_5 = arith.constant 0 : index
    %c0_6 = arith.constant 0 : index
    %34 = vector.load %arg3[%c0_5, %c0_6] : memref<16x128xf32, #tpu.memory_space<vmem>>, vector<16x128xf32>
    tpu.vector_store %arg3[%c0_5, %c0_6], %33 {strides = array<i32>} : memref<16x128xf32, #tpu.memory_space<vmem>>, vector<16x128xf32>,
    return
  }
  func.func @transform_0(%arg0: i32, %arg1: memref<1xi32, #tpu.memory_space<smem>>) -> (i32, i32) {
    %c0_i32 = arith.constant 0 : i32
    %c0_i32_0 = arith.constant 0 : i32
    return %arg0, %c0_i32 : i32, i32
  }
  func.func @transform_1(%arg0: i32, %arg1: memref<1xi32, #tpu.memory_space<smem>>) -> (i32, i32) {
    %c0_i32 = arith.constant 0 : i32
    %c0_i32_0 = arith.constant 0 : i32
    return %arg0, %c0_i32 : i32, i32
  }
}

</mosaic_0001>

<llo_original>
// kernel: tpu_custom_call.1
$region0: #{tpu_custom_call.1}
  #allocation0 [shape = 'u32[]', space=smem, size = 0x4, offset = 0x4, fixed_abs, tag = 'smem constant byte address 0x4 - core index']
  #allocation1 [shape = 'u32[144,128]{1,0:T(1,128)}', space=vmem, size = 0x12000, scoped, tag = 'internal scratch']
  #allocation2 [shape = 's32[1]{0}', space=sflag, size = 0x4, scoped, tag = 'scoped memory for tpu_custom_call.1']
  #allocation3 [shape = 's32[1]{0:T(128)S(6)}', space=smem, size = 0x200, scoped, tag = 'prefetched SMEM operand 0']
  %s0 = inlined_call_operand.<no memory space> [shape: s32[1], index: 0, kind: input, shape index: {}]
  %s1 = inlined_call_operand.hbm [shape: f32[16,128], index: 1, kind: input, shape index: {}]
  %s2 = inlined_call_operand.hbm [shape: f32[16,128], index: 2, kind: output, shape index: {}]
  %s3 = sld [smem:[#allocation0]]
  $region18: #{tpu_custom_call.1} parent=0
    _
  %s5 = ssub.s32 1, %s3
  %s6 = scalar_select 0, %s5, %s3
  %7 = sst [smem:[#allocation3]] %s0
  $region1: #{tpu_custom_call.1} parent=0
    #allocation4 [shape = 'u8[8192]{0}', space=vmem, size = 0x2000, scoped, tag = 'input window, operand 1, single buffered']
    #allocation5 [shape = 's32[1]{0}', space=sflag, size = 0x4, scoped, tag = 'scoped memory for tpu_custom_call.1']
    #allocation6 [shape = 's32[1]{0}', space=sflag, size = 0x4, scoped, tag = 'scoped memory for tpu_custom_call.1']
    #allocation7 [shape = 'u8[8192]{0}', space=vmem, size = 0x2000, scoped, tag = 'output window, operand 0, single buffered']
    %8 = vsyncpa [#allocation5], 0
    %9 = vsyncpa [#allocation6], 0
    // Predicated region
    $region2: #{tpu_custom_call.1} parent=1 // pred_check
      _
    $region3: #{tpu_custom_call.1} parent=1 // pred_check_branch
      %11 = sbr.rel (0) target = $region5
    $region4: #{tpu_custom_call.1} parent=1 // pred_region
      %s13 = ssub.s32 256, 256
      %14 = vsyncadd [#allocation5], %s13
      %s15 = sshll.u32 [#allocation4], 4
      %s16 = int_to_ptr.vmem [resolvable:$true] %s15
      %21 = dma.hbm_to_vmem [thread:$0]  %s1, 256, %s16, [#allocation5], 128, 128, 8
    $region5: #{tpu_custom_call.1} parent=1 // pred_fallthru
      _
    // Predicated region
    $region6: #{tpu_custom_call.1} parent=1 // pred_check
      _
    $region7: #{tpu_custom_call.1} parent=1 // pred_check_branch
      %23 = sbr.rel (0) target = $region9
    $region8: #{tpu_custom_call.1} parent=1 // pred_region
      %24 = dma.done [#allocation5], 256
    $region9: #{tpu_custom_call.1} parent=1 // pred_fallthru
      _
    %s25 = smul.u32 0, 16
    %v26 = vlaneseq
    %v27 = vshrl.u32 %v26, 7
    %v28 = vadd.s32 %v27, 8
    %v29 = vlaneseq
    %v30 = vand.u32 %v29, 127
    %v31 = vstv %s25
    %v32 = vadd.s32 %v31, %v27
    %v33 = vadd.s32 %v31, %v28
    %v34 = vmul.u32 %v32, 128
    %v35 = vmul.u32 %v33, 128
    %v36 = vadd.s32 %v34, %v30
    %v37 = vadd.s32 %v35, %v30
    %s38 = sld [smem:[#allocation3]]
    %s39 = smul.u32 %s38, 2654435761
    %v40 = vstv %s39
    %v41 = vxor.u32 %v36, %v40
    %v42 = vxor.u32 %v37, %v40
    %v43 = vshrl.u32 %v41, 16
    %v44 = vshrl.u32 %v42, 16
    %v45 = vxor.u32 %v41, %v43
    %v46 = vxor.u32 %v42, %v44
    %v47 = vmul.u32 %v45, 2246822507
    %v48 = vmul.u32 %v46, 2246822507
    %v49 = vshrl.u32 %v47, 13
    %v50 = vshrl.u32 %v48, 13
    %v51 = vxor.u32 %v47, %v49
    %v52 = vxor.u32 %v48, %v50
    %v53 = vmul.u32 %v51, 3266489909
    %v54 = vmul.u32 %v52, 3266489909
    %v55 = vshrl.u32 %v53, 16
    %v56 = vshrl.u32 %v54, 16
    %v57 = vxor.u32 %v53, %v55
    %v58 = vxor.u32 %v54, %v56
    %v59 = vshrl.u32 %v57, 8
    %v60 = vshrl.u32 %v58, 8
    %v61 = vcvt.s32.f32 %v59
    %v62 = vcvt.s32.f32 %v60
    %v63 = vmul.f32 %v61, 5.9604645e-08
    %v64 = vmul.f32 %v62, 5.9604645e-08
    %v65 = vmul.f32 %v63, 0.1
    %v66 = vmul.f32 %v64, 0.1
    %v67 = vld [vmem:[#allocation4] sm:$0xff]
    %v68 = vld [vmem:[#allocation4 + $0x8] sm:$0xff]
    %v69 = vadd.f32 %v67, %v65
    %v70 = vadd.f32 %v68, %v66
    %71 = vst [vmem:[#allocation7] sm:$0xff] %v69
    %72 = vst [vmem:[#allocation7 + $0x8] sm:$0xff] %v70
    // Predicated region
    $region10: #{tpu_custom_call.1} parent=1 // pred_check
      _
    $region11: #{tpu_custom_call.1} parent=1 // pred_check_branch
      %74 = sbr.rel (0) target = $region13
    $region12: #{tpu_custom_call.1} parent=1 // pred_region
      %s76 = ssub.s32 256, 256
      %77 = vsyncadd [#allocation6], %s76
      %s78 = sshll.u32 [#allocation7], 4
      %s79 = int_to_ptr.vmem [resolvable:$true] %s78
      %84 = dma.vmem_to_hbm [thread:$0]  %s79, 256, %s2, [#allocation6], 128, 128, 8
    $region13: #{tpu_custom_call.1} parent=1 // pred_fallthru
      _
    // Predicated region
    $region14: #{tpu_custom_call.1} parent=1 // pred_check
      _
    $region15: #{tpu_custom_call.1} parent=1 // pred_check_branch
      %86 = sbr.rel (0) target = $region17
    $region16: #{tpu_custom_call.1} parent=1 // pred_region
      %87 = dma.done [#allocation6], 256
    $region17: #{tpu_custom_call.1} parent=1 // pred_fallthru
      _
    %88 = vsyncpa [#allocation5], 1
    %89 = vsyncpa [#allocation6], 1

</llo_original>
